<compile_context>
chip_gen: v5e
topology: v5e:2x2
jax: 0.10.0
libtpu: 0.0.40
codegen_flags: <defaults>
</compile_context>

<pallas_src>
import jax
import jax.numpy as jnp
from jax.experimental import pallas as pl
from jax.experimental.pallas import tpu as pltpu

HIDDEN = 32


def lrp_critic_kernel(x_ref, w1_ref, b1_ref, w2_ref, b2_ref, w3_ref, b3_ref,
                      o_ref):
    """One batch tile: x (tb, D) f32 -> q (1, tb) f32 (lane-dense)."""
    x = x_ref[...]                                                # (tb, D)
    # fc1 + ReLU  (MXU matmul, f32 accumulate; bias/ReLU on VPU in f32)
    h1 = jnp.dot(x, w1_ref[...], preferred_element_type=jnp.float32)
    h1 = jnp.maximum(h1 + b1_ref[...], 0.0)                       # (tb, 32)
    # fc2 + ReLU
    h2 = jnp.dot(h1, w2_ref[...], preferred_element_type=jnp.float32)
    h2 = jnp.maximum(h2 + b2_ref[...], 0.0)                       # (tb, 32)
    # fc3 (single output unit): compute as (8,32) @ (tb,32)^T -> (8, tb) on the
    # MXU so the result comes out lane-dense along the batch.  Row 0 of w3_ref
    # holds the real fc3 weights; rows 1..7 are zero padding (free, mem-bound).
    q8 = jax.lax.dot_general(w3_ref[...], h2, (((1,), (1,)), ((), ())),
                             preferred_element_type=jnp.float32)  # (8, tb)
    o_ref[...] = (q8[0:1, :] + b3_ref[...]).astype(o_ref.dtype)   # (1, tb)


def _cdiv(a, b):
    return (a + b - 1) // b


def _round_up(n, m):
    return _cdiv(n, m) * m


def lrp_critic_forward(x, params, *, max_rows_per_tile=8192):
    """x: (B, input_shape) float32.  params: dict of PyTorch-layout weights."""
    w1, b1 = params["fc1_w"], params["fc1_b"]  # (32, in), (32,)
    w2, b2 = params["fc2_w"], params["fc2_b"]  # (32, 32), (32,)
    w3, b3 = params["fc3_w"], params["fc3_b"]  # (1, 32),  (1,)

    B, D = x.shape
    # Pick tb from B: n_target tiles of ~equal size, rounded up to a lane
    # multiple, so the padded tail wastes at most a small slice of one tile
    # and large batches get big tiles (amortizes per-grid-step overhead).
    n_target = max(1, _cdiv(B, max_rows_per_tile))
    tb = _round_up(_cdiv(B, n_target), 128)
    num_tiles = _cdiv(B, tb)
    b_pad = num_tiles * tb

    # Stream x in native f32 (no wrapper-side dtype cast -> no extra HBM pass).
    x_p = x.astype(jnp.float32)
    if b_pad != B:
        # Padded tail rows produce garbage (ReLU(b) propagates); sliced off below.
        x_p = jnp.pad(x_p, ((0, b_pad - B), (0, 0)))

    w1t = w1.T.astype(jnp.float32)                       # (D, 32)
    w2t = w2.T.astype(jnp.float32)                       # (32, 32)
    b1r = b1[None, :].astype(jnp.float32)                # (1, 32)
    b2r = b2[None, :].astype(jnp.float32)                # (1, 32)
    w3p = jnp.pad(w3.astype(jnp.float32), ((0, 7), (0, 0)))  # (8, 32), row0=w3
    b3r = b3.reshape(1, 1).astype(jnp.float32)           # (1, 1)

    const = lambda i: (0, 0)  # weights/biases: fetched once, resident in VMEM

    out = pl.pallas_call(
        lrp_critic_kernel,
        out_shape=jax.ShapeDtypeStruct((1, b_pad), jnp.float32),
        grid=(num_tiles,),
        in_specs=[
            pl.BlockSpec((tb, D), lambda i: (i, 0)),     # x: streamed per tile
            pl.BlockSpec((D, HIDDEN), const),            # w1^T
            pl.BlockSpec((1, HIDDEN), const),            # b1
            pl.BlockSpec((HIDDEN, HIDDEN), const),       # w2^T
            pl.BlockSpec((1, HIDDEN), const),            # b2
            pl.BlockSpec((8, HIDDEN), const),            # w3 (zero-padded rows)
            pl.BlockSpec((1, 1), const),                 # b3
        ],
        # Lane-dense output: one contiguous (1, tb) slab per tile.
        out_specs=pl.BlockSpec((1, tb), lambda i: (0, i)),
        compiler_params=pltpu.CompilerParams(
            dimension_semantics=("parallel",),           # v7x: shard across TCs
            vmem_limit_bytes=48 * 1024 * 1024),
    )(x_p, w1t, b1r, w2t, b2r, w3p, b3r)

    # (1, b_pad) -> (B, 1), dropping the padded tail.
    return out.reshape(b_pad, 1)[:B]


def init_params(key, input_shape, hidden=HIDDEN):
    """PyTorch nn.Linear default init: U[-1/sqrt(fan_in), 1/sqrt(fan_in)]."""
    ks = jax.random.split(key, 6)

    def lin(kw, kb, fan_in, fan_out):
        bound = 1.0 / jnp.sqrt(float(fan_in))
        w = jax.random.uniform(kw, (fan_out, fan_in), jnp.float32, -bound, bound)
        b = jax.random.uniform(kb, (fan_out,), jnp.float32, -bound, bound)
        return w, b

    w1, b1 = lin(ks[0], ks[1], input_shape, hidden)
    w2, b2 = lin(ks[2], ks[3], hidden, hidden)
    w3, b3 = lin(ks[4], ks[5], hidden, 1)
    return {"fc1_w": w1, "fc1_b": b1,
            "fc2_w": w2, "fc2_b": b2,
            "fc3_w": w3, "fc3_b": b3}


def reference_forward_f32(x, p):
    """Exact module semantics in f32 (kernel is now f32 end-to-end)."""
    h1 = jnp.maximum(x @ p["fc1_w"].T + p["fc1_b"], 0.0)
    h2 = jnp.maximum(h1 @ p["fc2_w"].T + p["fc2_b"], 0.0)
    return h2 @ p["fc3_w"].T + p["fc3_b"]


# TODO(synk): relprop/relprop2/relprop3 (LRP relevance backward passes) are not
# part of forward() and are not implemented here.

if __name__ == "__main__":
    key = jax.random.PRNGKey(0)
    k_x, k_p = jax.random.split(key)

    input_shape = 64  # critic input dim (state/obs concat size)
    params = init_params(k_p, input_shape)

    for batch in (8, 37):  # 37 exercises the ragged-tail padding path
        xk = jax.random.fold_in(k_x, batch)
        x = jax.random.normal(xk, (batch, input_shape), jnp.float32)

        q_tot = jax.block_until_ready(lrp_critic_forward(x, params))
        assert q_tot.shape == (batch, 1)

        ref = reference_forward_f32(x, params)
        assert jnp.allclose(q_tot, ref, atol=1e-3, rtol=1e-3), (
            "max abs err = %g" % float(jnp.max(jnp.abs(q_tot - ref))))

    print("KERNEL_OK")
</pallas_src>

<mosaic_0001>
module attributes {stable_mosaic.version = 11 : i64} {
  func.func @lrp_critic_kernel(%arg0: i32, %arg1: memref<128x64xf32, #tpu.memory_space<vmem>>, %arg2: memref<64x32xf32, #tpu.memory_space<vmem>>, %arg3: memref<1x32xf32, #tpu.memory_space<vmem>>, %arg4: memref<32x32xf32, #tpu.memory_space<vmem>>, %arg5: memref<1x32xf32, #tpu.memory_space<vmem>>, %arg6: memref<8x32xf32, #tpu.memory_space<vmem>>, %arg7: memref<1x1xf32, #tpu.memory_space<vmem>>, %arg8: memref<1x128xf32, #tpu.memory_space<vmem>>) attributes {dimension_semantics = [#tpu.dimension_semantics<parallel>], iteration_bounds = array<i64: 1>, scalar_prefetch = 0 : i64, scratch_operands = 0 : i64, tpu.core_type = #tpu.core_type<tc>, window_params = [{transform_indices = @transform_0, window_bounds = array<i64: 128, 64>}, {pipeline_mode = #tpu.pipeline_mode<synchronous>, transform_indices = @transform_1, window_bounds = array<i64: 64, 32>}, {pipeline_mode = #tpu.pipeline_mode<synchronous>, transform_indices = @transform_2, window_bounds = array<i64: 1, 32>}, {pipeline_mode = #tpu.pipeline_mode<synchronous>, transform_indices = @transform_3, window_bounds = array<i64: 32, 32>}, {pipeline_mode = #tpu.pipeline_mode<synchronous>, transform_indices = @transform_4, window_bounds = array<i64: 1, 32>}, {pipeline_mode = #tpu.pipeline_mode<synchronous>, transform_indices = @transform_5, window_bounds = array<i64: 8, 32>}, {pipeline_mode = #tpu.pipeline_mode<synchronous>, transform_indices = @transform_6, window_bounds = array<i64: 1, 1>}, {transform_indices = @transform_7, window_bounds = array<i64: 1, 128>}]} {
    %c0 = arith.constant 0 : index
    %c0_0 = arith.constant 0 : index
    %0 = vector.load %arg1[%c0, %c0_0] : memref<128x64xf32, #tpu.memory_space<vmem>>, vector<128x64xf32>
    %c0_1 = arith.constant 0 : index
    %c0_2 = arith.constant 0 : index
    %1 = vector.load %arg2[%c0_1, %c0_2] : memref<64x32xf32, #tpu.memory_space<vmem>>, vector<64x32xf32>
    %cst = arith.constant dense<0.000000e+00> : vector<128x32xf32>
    %2 = tpu.matmul %0, %1, %cst {dimension_numbers = #tpu.dot_dimension_numbers<[1], [0], [0], [1], [0, 0, 1, 1], [], []>} : vector<128x64xf32>, vector<64x32xf32>, vector<128x32xf32> -> vector<128x32xf32>
    %c0_3 = arith.constant 0 : index
    %c0_4 = arith.constant 0 : index
    %3 = vector.load %arg3[%c0_3, %c0_4] : memref<1x32xf32, #tpu.memory_space<vmem>>, vector<1x32xf32>
    %4 = vector.broadcast %3 : vector<1x32xf32> to vector<128x32xf32>
    %5 = arith.addf %2, %4 : vector<128x32xf32>
    %cst_5 = arith.constant 0.000000e+00 : f32
    %6 = vector.broadcast %cst_5 : f32 to vector<128x32xf32>
    %7 = arith.maximumf %5, %6 : vector<128x32xf32>
    %c0_6 = arith.constant 0 : index
    %c0_7 = arith.constant 0 : index
    %8 = vector.load %arg4[%c0_6, %c0_7] : memref<32x32xf32, #tpu.memory_space<vmem>>, vector<32x32xf32>
    %cst_8 = arith.constant dense<0.000000e+00> : vector<128x32xf32>
    %9 = tpu.matmul %7, %8, %cst_8 {dimension_numbers = #tpu.dot_dimension_numbers<[1], [0], [0], [1], [0, 0, 1, 1], [], []>} : vector<128x32xf32>, vector<32x32xf32>, vector<128x32xf32> -> vector<128x32xf32>
    %c0_9 = arith.constant 0 : index
    %c0_10 = arith.constant 0 : index
    %10 = vector.load %arg5[%c0_9, %c0_10] : memref<1x32xf32, #tpu.memory_space<vmem>>, vector<1x32xf32>
    %11 = vector.broadcast %10 : vector<1x32xf32> to vector<128x32xf32>
    %12 = arith.addf %9, %11 : vector<128x32xf32>
    %cst_11 = arith.constant 0.000000e+00 : f32
    %13 = vector.broadcast %cst_11 : f32 to vector<128x32xf32>
    %14 = arith.maximumf %12, %13 : vector<128x32xf32>
    %c0_12 = arith.constant 0 : index
    %c0_13 = arith.constant 0 : index
    %15 = vector.load %arg6[%c0_12, %c0_13] : memref<8x32xf32, #tpu.memory_space<vmem>>, vector<8x32xf32>
    %cst_14 = arith.constant dense<0.000000e+00> : vector<8x128xf32>
    %16 = tpu.matmul %15, %14, %cst_14 {dimension_numbers = #tpu.dot_dimension_numbers<[1], [1], [0], [0], [0, 0, 1, 0], [], []>} : vector<8x32xf32>, vector<128x32xf32>, vector<8x128xf32> -> vector<8x128xf32>
    %17 = vector.extract_strided_slice %16 {offsets = [0, 0], sizes = [1, 128], strides = [1, 1]} : vector<8x128xf32> to vector<1x128xf32>
    %c0_15 = arith.constant 0 : index
    %c0_16 = arith.constant 0 : index
    %18 = vector.load %arg7[%c0_15, %c0_16] : memref<1x1xf32, #tpu.memory_space<vmem>>, vector<1x1xf32>
    %19 = vector.broadcast %18 : vector<1x1xf32> to vector<1x128xf32>
    %20 = arith.addf %17, %19 : vector<1x128xf32>
    %c0_17 = arith.constant 0 : index
    %c0_18 = arith.constant 0 : index
    %21 = vector.load %arg8[%c0_17, %c0_18] : memref<1x128xf32, #tpu.memory_space<vmem>>, vector<1x128xf32>
    tpu.vector_store %arg8[%c0_17, %c0_18], %20 {strides = array<i32>} : memref<1x128xf32, #tpu.memory_space<vmem>>, vector<1x128xf32>,
    return
  }
  func.func @transform_0(%arg0: i32) -> (i32, i32) {
    %c0_i32 = arith.constant 0 : i32
    %c0_i32_0 = arith.constant 0 : i32
    return %arg0, %c0_i32 : i32, i32
  }
  func.func @transform_1(%arg0: i32) -> (i32, i32) {
    %c0_i32 = arith.constant 0 : i32
    %c0_i32_0 = arith.constant 0 : i32
    %c0_i32_1 = arith.constant 0 : i32
    return %c0_i32, %c0_i32_0 : i32, i32
  }
  func.func @transform_2(%arg0: i32) -> (i32, i32) {
    %c0_i32 = arith.constant 0 : i32
    %c0_i32_0 = arith.constant 0 : i32
    %c0_i32_1 = arith.constant 0 : i32
    return %c0_i32, %c0_i32_0 : i32, i32
  }
  func.func @transform_3(%arg0: i32) -> (i32, i32) {
    %c0_i32 = arith.constant 0 : i32
    %c0_i32_0 = arith.constant 0 : i32
    %c0_i32_1 = arith.constant 0 : i32
    return %c0_i32, %c0_i32_0 : i32, i32
  }
  func.func @transform_4(%arg0: i32) -> (i32, i32) {
    %c0_i32 = arith.constant 0 : i32
    %c0_i32_0 = arith.constant 0 : i32
    %c0_i32_1 = arith.constant 0 : i32
    return %c0_i32, %c0_i32_0 : i32, i32
  }
  func.func @transform_5(%arg0: i32) -> (i32, i32) {
    %c0_i32 = arith.constant 0 : i32
    %c0_i32_0 = arith.constant 0 : i32
    %c0_i32_1 = arith.constant 0 : i32
    return %c0_i32, %c0_i32_0 : i32, i32
  }
  func.func @transform_6(%arg0: i32) -> (i32, i32) {
    %c0_i32 = arith.constant 0 : i32
    %c0_i32_0 = arith.constant 0 : i32
    %c0_i32_1 = arith.constant 0 : i32
    return %c0_i32, %c0_i32_0 : i32, i32
  }
  func.func @transform_7(%arg0: i32) -> (i32, i32) {
    %c0_i32 = arith.constant 0 : i32
    %c0_i32_0 = arith.constant 0 : i32
    return %c0_i32, %arg0 : i32, i32
  }
}

</mosaic_0001>

<llo_original>
// kernel: tpu_custom_call.1
$region0: #{tpu_custom_call.1}
  #allocation0 [shape = 'u32[]', space=smem, size = 0x4, offset = 0x4, fixed_abs, tag = 'smem constant byte address 0x4 - core index']
  #allocation1 [shape = 'u32[72,128]{1,0:T(1,128)}', space=vmem, size = 0x9000, scoped, tag = 'internal scratch']
  #allocation2 [shape = 'f32[1,1]{1,0:T(1,128)S(1)}', space=vmem, size = 0x200, scoped, tag = 'scoped memory for tpu_custom_call.1']
  %s0 = inlined_call_operand.vmem [shape: f32[128,64], index: 0, kind: input, shape index: {}]
  %s1 = inlined_call_operand.vmem [shape: f32[64,32], index: 1, kind: input, shape index: {}]
  %s2 = inlined_call_operand.vmem [shape: f32[1,32], index: 2, kind: input, shape index: {}]
  %s3 = inlined_call_operand.vmem [shape: f32[32,32], index: 3, kind: input, shape index: {}]
  %s4 = inlined_call_operand.vmem [shape: f32[1,32], index: 4, kind: input, shape index: {}]
  %s5 = inlined_call_operand.vmem [shape: f32[8,32], index: 5, kind: input, shape index: {}]
  %s6 = inlined_call_operand.<no memory space> [shape: f32[1,1], index: 6, kind: input, shape index: {}]
  %s7 = inlined_call_operand.hbm [shape: f32[1,128], index: 7, kind: output, shape index: {}]
  %s8 = sld [smem:[#allocation0]]
  $region38: #{tpu_custom_call.1} parent=0
    _
  %s10 = ssub.s32 1, %s8
  %s11 = scalar_select 0, %s10, %s8
  %v12 = vstv %s6
  %13 = vst [vmem:[#allocation2] sm:$0x1] %v12
  $region1: #{tpu_custom_call.1} parent=0
    #allocation3 [shape = 'u8[512]{0}', space=vmem, size = 0x400, scoped, tag = 'output window, operand 0, single buffered']
    #allocation4 [shape = 's32[1]{0}', space=sflag, size = 0x4, scoped, tag = 'scoped memory for tpu_custom_call.1']
    %14 = vsyncpa [#allocation4], 0
    // Predicated region
    $region2: #{tpu_custom_call.1} parent=1 // pred_check
      _
    $region3: #{tpu_custom_call.1} parent=1 // pred_check_branch
      %16 = sbr.rel (0) target = $region5
    $region4: #{tpu_custom_call.1} parent=1 // pred_region
      _
    $region5: #{tpu_custom_call.1} parent=1 // pred_fallthru
      _
    // Predicated region
    $region6: #{tpu_custom_call.1} parent=1 // pred_check
      _
    $region7: #{tpu_custom_call.1} parent=1 // pred_check_branch
      %18 = sbr.rel (0) target = $region9
    $region8: #{tpu_custom_call.1} parent=1 // pred_region
      _
    $region9: #{tpu_custom_call.1} parent=1 // pred_fallthru
      _
    // Predicated region
    $region10: #{tpu_custom_call.1} parent=1 // pred_check
      _
    $region11: #{tpu_custom_call.1} parent=1 // pred_check_branch
      %20 = sbr.rel (0) target = $region13
    $region12: #{tpu_custom_call.1} parent=1 // pred_region
      _
    $region13: #{tpu_custom_call.1} parent=1 // pred_fallthru
      _
    // Predicated region
    $region14: #{tpu_custom_call.1} parent=1 // pred_check
      _
    $region15: #{tpu_custom_call.1} parent=1 // pred_check_branch
      %22 = sbr.rel (0) target = $region17
    $region16: #{tpu_custom_call.1} parent=1 // pred_region
      _
    $region17: #{tpu_custom_call.1} parent=1 // pred_fallthru
      _
    // Predicated region
    $region18: #{tpu_custom_call.1} parent=1 // pred_check
      _
    $region19: #{tpu_custom_call.1} parent=1 // pred_check_branch
      %24 = sbr.rel (0) target = $region21
    $region20: #{tpu_custom_call.1} parent=1 // pred_region
      _
    $region21: #{tpu_custom_call.1} parent=1 // pred_fallthru
      _
    // Predicated region
    $region22: #{tpu_custom_call.1} parent=1 // pred_check
      _
    $region23: #{tpu_custom_call.1} parent=1 // pred_check_branch
      %26 = sbr.rel (0) target = $region25
    $region24: #{tpu_custom_call.1} parent=1 // pred_region
      _
    $region25: #{tpu_custom_call.1} parent=1 // pred_fallthru
      _
    // Predicated region
    $region26: #{tpu_custom_call.1} parent=1 // pred_check
      _
    $region27: #{tpu_custom_call.1} parent=1 // pred_check_branch
      %28 = sbr.rel (0) target = $region29
    $region28: #{tpu_custom_call.1} parent=1 // pred_region
      _
    $region29: #{tpu_custom_call.1} parent=1 // pred_fallthru
      _
    %v29 = vld [vmem:[%s0] sm:$0xff]
    %v30 = vld [vmem:[%s0 + $0x8] sm:$0xff]
    %v31 = vld [vmem:[%s0 + $0x10] sm:$0xff]
    %v32 = vld [vmem:[%s0 + $0x18] sm:$0xff]
    %v33 = vld [vmem:[%s0 + $0x20] sm:$0xff]
    %v34 = vld [vmem:[%s0 + $0x28] sm:$0xff]
    %v35 = vld [vmem:[%s0 + $0x30] sm:$0xff]
    %v36 = vld [vmem:[%s0 + $0x38] sm:$0xff]
    %v37 = vld [vmem:[%s0 + $0x40] sm:$0xff]
    %v38 = vld [vmem:[%s0 + $0x48] sm:$0xff]
    %v39 = vld [vmem:[%s0 + $0x50] sm:$0xff]
    %v40 = vld [vmem:[%s0 + $0x58] sm:$0xff]
    %v41 = vld [vmem:[%s0 + $0x60] sm:$0xff]
    %v42 = vld [vmem:[%s0 + $0x68] sm:$0xff]
    %v43 = vld [vmem:[%s0 + $0x70] sm:$0xff]
    %v44 = vld [vmem:[%s0 + $0x78] sm:$0xff]
    %v45 = vld [vmem:[%s1] sm:$0xff]
    %v46 = vld [vmem:[%s1 + $0x8] sm:$0xff]
    %v47 = vld [vmem:[%s1 + $0x10] sm:$0xff]
    %v48 = vld [vmem:[%s1 + $0x18] sm:$0xff]
    %v49 = vld [vmem:[%s1 + $0x20] sm:$0xff]
    %v50 = vld [vmem:[%s1 + $0x28] sm:$0xff]
    %v51 = vld [vmem:[%s1 + $0x30] sm:$0xff]
    %v52 = vld [vmem:[%s1 + $0x38] sm:$0xff]
    %v53 = vld [vmem:[%s2] sm:$0x1]
    %v55 = vperm.slane %v53, 0
    %vm57 = vcmask 523264
    %v59 = vsel %vm57, %v29, 0
    %v62 = vsel %vm57, %v30, 0
    %v65 = vsel %vm57, %v31, 0
    %v68 = vsel %vm57, %v32, 0
    %v71 = vsel %vm57, %v33, 0
    %v74 = vsel %vm57, %v34, 0
    %v77 = vsel %vm57, %v35, 0
    %v80 = vsel %vm57, %v36, 0
    %v83 = vsel %vm57, %v37, 0
    %v86 = vsel %vm57, %v38, 0
    %v89 = vsel %vm57, %v39, 0
    %v92 = vsel %vm57, %v40, 0
    %v95 = vsel %vm57, %v41, 0
    %v98 = vsel %vm57, %v42, 0
    %v101 = vsel %vm57, %v43, 0
    %v104 = vsel %vm57, %v44, 0
    %106 = vmatpush.msra.mxu0 0.0
    %107 = vmatpush.msra.mxu0 0.0
    %108 = vmatpush.msra.mxu0 0.0
    %109 = vmatpush.msra.mxu0 0.0
    %110 = vmatpush.msra.mxu0 0.0
    %111 = vmatpush.msra.mxu0 0.0
    %112 = vmatpush.msra.mxu0 0.0
    %113 = vmatpush.msra.mxu0 0.0
    %114 = vmatpush.msra.mxu0 %v52
    %115 = vmatpush.msra.mxu0 %v51
    %116 = vmatpush.msra.mxu0 %v50
    %117 = vmatpush.msra.mxu0 %v49
    %118 = vmatpush.msra.mxu0 %v48
    %119 = vmatpush.msra.mxu0 %v47
    %120 = vmatpush.msra.mxu0 %v46
    %121 = vmatpush.msra.mxu0 %v45
    %122 = vmatmul.f32.gmra.mxu0 %v59
    %v123 = vpop.f32.mrf.mxu0
    %v124 = vadd.f32 %v55, %v123
    %125 = vmatmul.f32.gmra.mxu0 %v62
    %v126 = vpop.f32.mrf.mxu0
    %v127 = vadd.f32 %v55, %v126
    %128 = vmatmul.f32.gmra.mxu0 %v65
    %v129 = vpop.f32.mrf.mxu0
    %v130 = vadd.f32 %v55, %v129
    %131 = vmatmul.f32.gmra.mxu0 %v68
    %v132 = vpop.f32.mrf.mxu0
    %v133 = vadd.f32 %v55, %v132
    %134 = vmatmul.f32.gmra.mxu0 %v71
    %v135 = vpop.f32.mrf.mxu0
    %v136 = vadd.f32 %v55, %v135
    %137 = vmatmul.f32.gmra.mxu0 %v74
    %v138 = vpop.f32.mrf.mxu0
    %v139 = vadd.f32 %v55, %v138
    %140 = vmatmul.f32.gmra.mxu0 %v77
    %v141 = vpop.f32.mrf.mxu0
    %v142 = vadd.f32 %v55, %v141
    %143 = vmatmul.f32.gmra.mxu0 %v80
    %v144 = vpop.f32.mrf.mxu0
    %v145 = vadd.f32 %v55, %v144
    %146 = vmatmul.f32.gmra.mxu0 %v83
    %v147 = vpop.f32.mrf.mxu0
    %v148 = vadd.f32 %v55, %v147
    %149 = vmatmul.f32.gmra.mxu0 %v86
    %v150 = vpop.f32.mrf.mxu0
    %v151 = vadd.f32 %v55, %v150
    %152 = vmatmul.f32.gmra.mxu0 %v89
    %v153 = vpop.f32.mrf.mxu0
    %v154 = vadd.f32 %v55, %v153
    %155 = vmatmul.f32.gmra.mxu0 %v92
    %v156 = vpop.f32.mrf.mxu0
    %v157 = vadd.f32 %v55, %v156
    %158 = vmatmul.f32.gmra.mxu0 %v95
    %v159 = vpop.f32.mrf.mxu0
    %v160 = vadd.f32 %v55, %v159
    %161 = vmatmul.f32.gmra.mxu0 %v98
    %v162 = vpop.f32.mrf.mxu0
    %v163 = vadd.f32 %v55, %v162
    %164 = vmatmul.f32.gmra.mxu0 %v101
    %v165 = vpop.f32.mrf.mxu0
    %v166 = vadd.f32 %v55, %v165
    %167 = vmatmul.f32.gmra.mxu0 %v104
    %v168 = vpop.f32.mrf.mxu0
    %v169 = vadd.f32 %v55, %v168
    %170 = vdwg.mxu0
    %v171 = vmax.f32 %v124, 0.0
    %v172 = vmax.f32 %v127, 0.0
    %v173 = vmax.f32 %v130, 0.0
    %v174 = vmax.f32 %v133, 0.0
    %v175 = vmax.f32 %v136, 0.0
    %v176 = vmax.f32 %v139, 0.0
    %v177 = vmax.f32 %v142, 0.0
    %v178 = vmax.f32 %v145, 0.0
    %v179 = vmax.f32 %v148, 0.0
    %v180 = vmax.f32 %v151, 0.0
    %v181 = vmax.f32 %v154, 0.0
    %v182 = vmax.f32 %v157, 0.0
    %v183 = vmax.f32 %v160, 0.0
    %v184 = vmax.f32 %v163, 0.0
    %v185 = vmax.f32 %v166, 0.0
    %v186 = vmax.f32 %v169, 0.0
    %v187 = vld [vmem:[%s3] sm:$0xff]
    %v188 = vld [vmem:[%s3 + $0x8] sm:$0xff]
    %v189 = vld [vmem:[%s3 + $0x10] sm:$0xff]
    %v190 = vld [vmem:[%s3 + $0x18] sm:$0xff]
    %v191 = vld [vmem:[%s4] sm:$0x1]
    %v193 = vperm.slane %v191, 0
    %vm195 = vcmask 261120
    %v197 = vsel %vm195, %v171, 0
    %v200 = vsel %vm195, %v172, 0
    %v203 = vsel %vm195, %v173, 0
    %v206 = vsel %vm195, %v174, 0
    %v209 = vsel %vm195, %v175, 0
    %v212 = vsel %vm195, %v176, 0
    %v215 = vsel %vm195, %v177, 0
    %v218 = vsel %vm195, %v178, 0
    %v221 = vsel %vm195, %v179, 0
    %v224 = vsel %vm195, %v180, 0
    %v227 = vsel %vm195, %v181, 0
    %v230 = vsel %vm195, %v182, 0
    %v233 = vsel %vm195, %v183, 0
    %v236 = vsel %vm195, %v184, 0
    %v239 = vsel %vm195, %v185, 0
    %v242 = vsel %vm195, %v186, 0
    %244 = vmatpush.msra.mxu0 0.0
    %245 = vmatpush.msra.mxu0 0.0
    %246 = vmatpush.msra.mxu0 0.0
    %247 = vmatpush.msra.mxu0 0.0
    %248 = vmatpush.msra.mxu0 0.0
    %249 = vmatpush.msra.mxu0 0.0
    %250 = vmatpush.msra.mxu0 0.0
    %251 = vmatpush.msra.mxu0 0.0
    %252 = vmatpush.msra.mxu0 0.0
    %253 = vmatpush.msra.mxu0 0.0
    %254 = vmatpush.msra.mxu0 0.0
    %255 = vmatpush.msra.mxu0 0.0
    %256 = vmatpush.msra.mxu0 %v190
    %257 = vmatpush.msra.mxu0 %v189
    %258 = vmatpush.msra.mxu0 %v188
    %259 = vmatpush.msra.mxu0 %v187
    %260 = vmatmul.f32.gmra.mxu0 %v197
    %v261 = vpop.f32.mrf.mxu0
    %v262 = vadd.f32 %v193, %v261
    %263 = vmatmul.f32.gmra.mxu0 %v200
    %v264 = vpop.f32.mrf.mxu0
    %v265 = vadd.f32 %v193, %v264
    %266 = vmatmul.f32.gmra.mxu0 %v203
    %v267 = vpop.f32.mrf.mxu0
    %v268 = vadd.f32 %v193, %v267
    %269 = vmatmul.f32.gmra.mxu0 %v206
    %v270 = vpop.f32.mrf.mxu0
    %v271 = vadd.f32 %v193, %v270
    %272 = vmatmul.f32.gmra.mxu0 %v209
    %v273 = vpop.f32.mrf.mxu0
    %v274 = vadd.f32 %v193, %v273
    %275 = vmatmul.f32.gmra.mxu0 %v212
    %v276 = vpop.f32.mrf.mxu0
    %v277 = vadd.f32 %v193, %v276
    %278 = vmatmul.f32.gmra.mxu0 %v215
    %v279 = vpop.f32.mrf.mxu0
    %v280 = vadd.f32 %v193, %v279
    %281 = vmatmul.f32.gmra.mxu0 %v218
    %v282 = vpop.f32.mrf.mxu0
    %v283 = vadd.f32 %v193, %v282
    %284 = vmatmul.f32.gmra.mxu0 %v221
    %v285 = vpop.f32.mrf.mxu0
    %v286 = vadd.f32 %v193, %v285
    %287 = vmatmul.f32.gmra.mxu0 %v224
    %v288 = vpop.f32.mrf.mxu0
    %v289 = vadd.f32 %v193, %v288
    %290 = vmatmul.f32.gmra.mxu0 %v227
    %v291 = vpop.f32.mrf.mxu0
    %v292 = vadd.f32 %v193, %v291
    %293 = vmatmul.f32.gmra.mxu0 %v230
    %v294 = vpop.f32.mrf.mxu0
    %v295 = vadd.f32 %v193, %v294
    %296 = vmatmul.f32.gmra.mxu0 %v233
    %v297 = vpop.f32.mrf.mxu0
    %v298 = vadd.f32 %v193, %v297
    %299 = vmatmul.f32.gmra.mxu0 %v236
    %v300 = vpop.f32.mrf.mxu0
    %v301 = vadd.f32 %v193, %v300
    %302 = vmatmul.f32.gmra.mxu0 %v239
    %v303 = vpop.f32.mrf.mxu0
    %v304 = vadd.f32 %v193, %v303
    %305 = vmatmul.f32.gmra.mxu0 %v242
    %v306 = vpop.f32.mrf.mxu0
    %v307 = vadd.f32 %v193, %v306
    %308 = vdwg.mxu0
    %v309 = vmax.f32 %v262, 0.0
    %v310 = vmax.f32 %v265, 0.0
    %v311 = vmax.f32 %v268, 0.0
    %v312 = vmax.f32 %v271, 0.0
    %v313 = vmax.f32 %v274, 0.0
    %v314 = vmax.f32 %v277, 0.0
    %v315 = vmax.f32 %v280, 0.0
    %v316 = vmax.f32 %v283, 0.0
    %v317 = vmax.f32 %v286, 0.0
    %v318 = vmax.f32 %v289, 0.0
    %v319 = vmax.f32 %v292, 0.0
    %v320 = vmax.f32 %v295, 0.0
    %v321 = vmax.f32 %v298, 0.0
    %v322 = vmax.f32 %v301, 0.0
    %v323 = vmax.f32 %v304, 0.0
    %v324 = vmax.f32 %v307, 0.0
    %v325 = vld [vmem:[%s5] sm:$0xff]
    %v327 = vsel %vm195, %v325, 0
    %v330 = vsel %vm195, %v309, 0
    %v333 = vsel %vm195, %v310, 0
    %v336 = vsel %vm195, %v311, 0
    %v339 = vsel %vm195, %v312, 0
    %v342 = vsel %vm195, %v313, 0
    %v345 = vsel %vm195, %v314, 0
    %v348 = vsel %vm195, %v315, 0
    %v351 = vsel %vm195, %v316, 0
    %v354 = vsel %vm195, %v317, 0
    %v357 = vsel %vm195, %v318, 0
    %v360 = vsel %vm195, %v319, 0
    %v363 = vsel %vm195, %v320, 0
    %v366 = vsel %vm195, %v321, 0
    %v369 = vsel %vm195, %v322, 0
    %v372 = vsel %vm195, %v323, 0
    %v375 = vsel %vm195, %v324, 0
    %377 = vmatpush.xpose.msra.mxu0 %v375
    %378 = vmatpush.xpose.msra.mxu0 %v372
    %379 = vmatpush.xpose.msra.mxu0 %v369
    %380 = vmatpush.xpose.msra.mxu0 %v366
    %381 = vmatpush.xpose.msra.mxu0 %v363
    %382 = vmatpush.xpose.msra.mxu0 %v360
    %383 = vmatpush.xpose.msra.mxu0 %v357
    %384 = vmatpush.xpose.msra.mxu0 %v354
    %385 = vmatpush.xpose.msra.mxu0 %v351
    %386 = vmatpush.xpose.msra.mxu0 %v348
    %387 = vmatpush.xpose.msra.mxu0 %v345
    %388 = vmatpush.xpose.msra.mxu0 %v342
    %389 = vmatpush.xpose.msra.mxu0 %v339
    %390 = vmatpush.xpose.msra.mxu0 %v336
    %391 = vmatpush.xpose.msra.mxu0 %v333
    %392 = vmatpush.xpose.msra.mxu0 %v330
    %393 = vmatmul.f32.gmra.mxu0 %v327
    %v394 = vpop.f32.mrf.mxu0
    %v395 = vadd.f32 0.0, %v394
    %396 = vdwg.mxu0
    %v397 = vld [vmem:[#allocation2] sm:$0x1]
    %399 = vset.pattern.permute.xlu0 0
    %400 = vperm.xlu0 %399, %v397
    %v401 = vpop.permute.xlu0 %400
    %v403 = vperm.slane %v401, 0
    %v404 = vadd.f32 %v395, %v403
    %405 = vst [vmem:[#allocation3] sm:$0x1] %v404
    // Predicated region
    $region30: #{tpu_custom_call.1} parent=1 // pred_check
      _
    $region31: #{tpu_custom_call.1} parent=1 // pred_check_branch
      %407 = sbr.rel (0) target = $region33
    $region32: #{tpu_custom_call.1} parent=1 // pred_region
      %409 = vsyncadd [#allocation4], 0
      %s411 = sshll.u32 [#allocation3], 4
      %s412 = int_to_ptr.vmem [resolvable:$true] %s411
      %s413 = sshll.u32 %s7, 4
      %s414 = int_to_ptr.hbm [resolvable:$true] %s413
      %416 = dma.vmem_to_hbm [thread:$0]  %s412, 16, %s414, [#allocation4]
    $region33: #{tpu_custom_call.1} parent=1 // pred_fallthru
      _
    // Predicated region
    $region34: #{tpu_custom_call.1} parent=1 // pred_check
      _
    $region35: #{tpu_custom_call.1} parent=1 // pred_check_branch
      %418 = sbr.rel (0) target = $region37
    $region36: #{tpu_custom_call.1} parent=1 // pred_region
      %420 = dma.done [#allocation4], 16
    $region37: #{tpu_custom_call.1} parent=1 // pred_fallthru
      _
    %421 = vsyncpa [#allocation4], 1

</llo_original>
